<compile_context>
chip_gen: v7x
topology: tpu7x:2x2x1
jax: 0.10.0
libtpu: 0.0.40
codegen_flags: <defaults>
</compile_context>

<pallas_src>
import functools

import jax
import jax.numpy as jnp
from jax.experimental import pallas as pl
from jax.experimental.pallas import tpu as pltpu

_VMEM_LIMIT = 48 * 1024 * 1024   # <= 64 MiB/TC (v7x); v5e/v6e have 128 MiB
_VMEM_BUDGET = 20 * 1024 * 1024  # target working set used for tile sizing


def _round_up(x, m):
    return ((x + m - 1) // m) * m


def _pow2_divisor(m, cap=1024):
    t = 1
    while t * 2 <= cap and m % (t * 2) == 0:
        t *= 2
    return t


def _largest_divisor_leq(n, cap):
    cap = max(1, min(n, cap))
    for d in range(cap, 0, -1):
        if n % d == 0:
            return d
    return 1


# ----------------------------------------------------------------------------
# Kernel 1: matmul with resident weights + BatchNorm-statistics epilogue
# ----------------------------------------------------------------------------
def _matmul_stats_kernel(a_ref, b_ref, o_ref, stats_ref):
    acc = jnp.dot(a_ref[...], b_ref[...], preferred_element_type=jnp.float32)
    o_ref[...] = acc.astype(o_ref.dtype)        # single bf16 store
    s1 = jnp.sum(acc, axis=0, keepdims=True)
    s2 = jnp.sum(acc * acc, axis=0, keepdims=True)
    row = jax.lax.broadcasted_iota(jnp.int32, stats_ref.shape, 0)
    stats_ref[...] = jnp.where(row == 0, s1, jnp.where(row == 1, s2, 0.0))


def pallas_matmul_stats(a, b):
    """a: [M, K], b: [K, N] bf16 weights (kept fully resident in VMEM).

    Returns (y [M_pad, N] bf16, colsum [N] f32, colsumsq [N] f32, M).
    Zero-padded M rows contribute exactly 0 to the column statistics.
    """
    M, K = a.shape
    Kb, N = b.shape
    assert K == Kb
    a = a.astype(jnp.bfloat16)
    b = b.astype(jnp.bfloat16)

    # M tile: largest power of two <= 512 whose working set (A in, y out, f32
    # accumulator, double-buffered resident B) fits the VMEM budget.
    tm = 512
    fixed = 4 * K * N                                # B, bf16, 2 buffers
    while tm > 16 and fixed + 4 * tm * (K + N) + 4 * tm * N > _VMEM_BUDGET:
        tm //= 2
    M_pad = _round_up(M, 16)
    if M_pad <= tm:
        tm = M_pad
    else:
        M_pad = _round_up(M_pad, tm)
    if M_pad != M:
        a = jnp.zeros((M_pad, K), jnp.bfloat16).at[:M].set(a)
    m_tiles = M_pad // tm

    y, stats = pl.pallas_call(
        _matmul_stats_kernel,
        out_shape=(jax.ShapeDtypeStruct((M_pad, N), jnp.bfloat16),
                   jax.ShapeDtypeStruct((m_tiles * 8, N), jnp.float32)),
        grid_spec=pltpu.PrefetchScalarGridSpec(
            num_scalar_prefetch=0,
            grid=(m_tiles,),
            in_specs=[pl.BlockSpec((tm, K), lambda i: (i, 0)),
                      pl.BlockSpec((K, N), lambda i: (0, 0))],   # resident B
            out_specs=(pl.BlockSpec((tm, N), lambda i: (i, 0)),
                       pl.BlockSpec((8, N), lambda i: (i, 0))),
        ),
        compiler_params=pltpu.CompilerParams(
            dimension_semantics=("parallel",),
            vmem_limit_bytes=_VMEM_LIMIT,
        ),
    )(a, b)

    st = stats.reshape(m_tiles, 8, N)
    return y, jnp.sum(st[:, 0, :], axis=0), jnp.sum(st[:, 1, :], axis=0), M


# ----------------------------------------------------------------------------
# Kernel 2: implicit-GEMM 3x3 stride-1 conv (padded-grid layout) + BN stats
# ----------------------------------------------------------------------------
def _conv3x3_stats_kernel(x_ref, w_ref, mask_ref, o_ref, stats_ref, *, H, W, bi):
    Wp = W + 2
    Mv = H * Wp
    base = 2 * Wp
    cout = o_ref.shape[-1]
    mask = mask_ref[...]                               # (Mv, 1) f32 column mask
    s1 = jnp.zeros((1, cout), jnp.float32)
    s2 = jnp.zeros((1, cout), jnp.float32)
    for img in range(bi):
        acc = None
        for p in range(9):
            kh, kw = p // 3, p % 3
            start = base + (kh - 1) * Wp + (kw - 1)    # static, in-bounds
            a = x_ref[img, pl.ds(start, Mv), :]
            part = jnp.dot(a, w_ref[p], preferred_element_type=jnp.float32)
            acc = part if acc is None else acc + part
        o_ref[img, pl.ds(base, Mv), :] = acc.astype(o_ref.dtype)
        valid = acc * mask                             # zero the garbage columns
        s1 = s1 + jnp.sum(valid, axis=0, keepdims=True)
        s2 = s2 + jnp.sum(valid * valid, axis=0, keepdims=True)
    row = jax.lax.broadcasted_iota(jnp.int32, stats_ref.shape, 0)
    stats_ref[...] = jnp.where(row == 0, s1, jnp.where(row == 1, s2, 0.0))


def pallas_conv3x3_stats(x_pad, w9, n_img, H, W):
    """3x3 stride-1 pad-1 conv on the zero-framed padded-grid layout.

    x_pad: [n_img, L, Cin] bf16 with L = (H+4)*(W+2); real data at rows 2..H+1,
    cols 1..W of each per-image grid, zero frame.  w9: [9, Cin, Cout] bf16.
    Returns (y [n_img, L, Cout] bf16 (frame rows are garbage; the BN-apply
    masks them), colsum [Cout], colsumsq [Cout], count).
    """
    _, L, Cin = x_pad.shape
    Cout = w9.shape[-1]
    Wp = W + 2
    Mv = H * Wp
    assert L == (H + 4) * Wp

    fixed = 4 * 9 * Cin * Cout                         # resident taps, 2 buffers
    per_img = 4 * L * (Cin + Cout) + 4 * Mv * Cout
    bi = max(1, int((_VMEM_BUDGET - fixed) // max(per_img, 1)))
    bi = min(bi, 8)
    if n_img >= 2:
        bi = min(bi, max(1, n_img // 2))               # >= 2 grid steps (v7x)
    bi = _largest_divisor_leq(n_img, bi)
    n_tiles = n_img // bi

    col = jnp.arange(Mv, dtype=jnp.int32) % Wp
    mask = ((col >= 1) & (col <= W)).astype(jnp.float32).reshape(Mv, 1)

    y, stats = pl.pallas_call(
        functools.partial(_conv3x3_stats_kernel, H=H, W=W, bi=bi),
        out_shape=(jax.ShapeDtypeStruct((n_img, L, Cout), jnp.bfloat16),
                   jax.ShapeDtypeStruct((n_tiles * 8, Cout), jnp.float32)),
        grid_spec=pltpu.PrefetchScalarGridSpec(
            num_scalar_prefetch=0,
            grid=(n_tiles,),
            in_specs=[pl.BlockSpec((bi, L, Cin), lambda i: (i, 0, 0)),
                      pl.BlockSpec((9, Cin, Cout), lambda i: (0, 0, 0)),
                      pl.BlockSpec((Mv, 1), lambda i: (0, 0))],
            out_specs=(pl.BlockSpec((bi, L, Cout), lambda i: (i, 0, 0)),
                       pl.BlockSpec((8, Cout), lambda i: (i, 0))),
        ),
        compiler_params=pltpu.CompilerParams(
            dimension_semantics=("parallel",),
            vmem_limit_bytes=_VMEM_LIMIT,
        ),
    )(x_pad.astype(jnp.bfloat16), w9, mask)

    st = stats.reshape(n_tiles, 8, Cout)
    return (y, jnp.sum(st[:, 0, :], axis=0), jnp.sum(st[:, 1, :], axis=0),
            n_img * H * W)


# ----------------------------------------------------------------------------
# Kernel 3: streaming BN apply (scale/shift [+ReLU]) on flat activations
# ----------------------------------------------------------------------------
def _bn_apply_flat_kernel(y_ref, sc_ref, sh_ref, o_ref, *, relu):
    v = y_ref[...].astype(jnp.float32) * sc_ref[...] + sh_ref[...]
    if relu:
        v = jnp.maximum(v, 0.0)
    o_ref[...] = v.astype(o_ref.dtype)


def pallas_bn_apply_flat(y_pad, scale, shift, true_m, relu=True,
                         out_dtype=jnp.bfloat16):
    M_pad, N = y_pad.shape
    # lane-dense folding for narrow channel counts (e.g. 64 -> 128 lanes)
    f = 1
    if N < 128 and 128 % N == 0:
        ff = 128 // N
        if M_pad % ff == 0 and (M_pad // ff) % 8 == 0:
            f = ff
    if f > 1:
        y_pad = y_pad.reshape(M_pad // f, N * f)
        scale = jnp.tile(scale, f)
        shift = jnp.tile(shift, f)
    Mp2, N2 = y_pad.shape
    tm = _pow2_divisor(Mp2, cap=1024)

    out = pl.pallas_call(
        functools.partial(_bn_apply_flat_kernel, relu=relu),
        out_shape=jax.ShapeDtypeStruct((Mp2, N2), out_dtype),
        grid_spec=pltpu.PrefetchScalarGridSpec(
            num_scalar_prefetch=0,
            grid=(Mp2 // tm,),
            in_specs=[pl.BlockSpec((tm, N2), lambda i: (i, 0)),
                      pl.BlockSpec((1, N2), lambda i: (0, 0)),
                      pl.BlockSpec((1, N2), lambda i: (0, 0))],
            out_specs=pl.BlockSpec((tm, N2), lambda i: (i, 0)),
        ),
        compiler_params=pltpu.CompilerParams(
            dimension_semantics=("parallel",),
            vmem_limit_bytes=_VMEM_LIMIT,
        ),
    )(y_pad, scale.reshape(1, N2).astype(jnp.float32),
      shift.reshape(1, N2).astype(jnp.float32))
    if f > 1:
        out = out.reshape(M_pad, N)
    return out[:true_m]


# ----------------------------------------------------------------------------
# Kernel 4: BN apply (+residual +ReLU +frame mask) on the padded-grid layout
# ----------------------------------------------------------------------------
def _bn_apply_padded_kernel(y_ref, sc_ref, sh_ref, m_ref, *rest, relu, has_res):
    if has_res:
        res_ref, o_ref = rest
    else:
        (o_ref,) = rest
    v = y_ref[...].astype(jnp.float32) * sc_ref[...] + sh_ref[...]
    if has_res:
        v = v + res_ref[...].astype(jnp.float32)
    if relu:
        v = jnp.maximum(v, 0.0)
    # zero the frame / garbage positions (they become the next conv's zero
    # padding); select (not multiply) so uninitialized frame rows cannot leak
    # non-finite values.
    v = jnp.where(m_ref[...] > 0.0, v, 0.0)
    o_ref[...] = v.astype(o_ref.dtype)


def pallas_bn_apply_padded(y_img, scale, shift, n_img, H, W,
                           residual=None, relu=True):
    _, L, C = y_img.shape
    Wp = W + 2
    assert L == (H + 4) * Wp
    r = jnp.arange(L, dtype=jnp.int32)
    yy = r // Wp
    xx = r % Wp
    mask = ((yy >= 2) & (yy < H + 2) & (xx >= 1) & (xx <= W)).astype(jnp.float32)

    # lane-dense folding for 64-channel layers: view (L, 64) as (L/2, 128)
    f = 1
    if C < 128 and 128 % C == 0 and L % (128 // C) == 0:
        f = 128 // C
    L2, C2 = L // f, C * f
    if f > 1:
        y_img = y_img.reshape(n_img, L2, C2)
        if residual is not None:
            residual = residual.reshape(n_img, L2, C2)
        scale = jnp.tile(scale, f)
        shift = jnp.tile(shift, f)
        mask3 = jnp.repeat(mask.reshape(L2, f), C, axis=1).reshape(1, L2, C2)
    else:
        mask3 = mask.reshape(1, L, 1)

    n_arrays = 3 if residual is not None else 2
    per_img = 4 * L2 * C2 * n_arrays
    bi = max(1, int(_VMEM_BUDGET // max(per_img, 1)))
    bi = min(bi, 8)
    if n_img >= 2:
        bi = min(bi, max(1, n_img // 2))
    bi = _largest_divisor_leq(n_img, bi)
    n_tiles = n_img // bi

    in_specs = [pl.BlockSpec((bi, L2, C2), lambda i: (i, 0, 0)),
                pl.BlockSpec((1, 1, C2), lambda i: (0, 0, 0)),
                pl.BlockSpec((1, 1, C2), lambda i: (0, 0, 0)),
                pl.BlockSpec(mask3.shape, lambda i: (0, 0, 0))]
    args = [y_img,
            scale.reshape(1, 1, C2).astype(jnp.float32),
            shift.reshape(1, 1, C2).astype(jnp.float32),
            mask3]
    if residual is not None:
        in_specs.append(pl.BlockSpec((bi, L2, C2), lambda i: (i, 0, 0)))
        args.append(residual.astype(jnp.bfloat16))

    out = pl.pallas_call(
        functools.partial(_bn_apply_padded_kernel, relu=relu,
                          has_res=residual is not None),
        out_shape=jax.ShapeDtypeStruct((n_img, L2, C2), jnp.bfloat16),
        grid_spec=pltpu.PrefetchScalarGridSpec(
            num_scalar_prefetch=0,
            grid=(n_tiles,),
            in_specs=in_specs,
            out_specs=pl.BlockSpec((bi, L2, C2), lambda i: (i, 0, 0)),
        ),
        compiler_params=pltpu.CompilerParams(
            dimension_semantics=("parallel",),
            vmem_limit_bytes=_VMEM_LIMIT,
        ),
    )(*args)
    return out.reshape(n_img, L, C)


# ----------------------------------------------------------------------------
# BatchNorm math (training-mode batch statistics, biased variance)
# ----------------------------------------------------------------------------
def _bn_scale_shift(colsum, colsumsq, count, gamma, beta, eps=1e-5):
    mean = colsum / count
    var = jnp.maximum(colsumsq / count - mean * mean, 0.0)
    inv = jax.lax.rsqrt(var + eps)
    scale = gamma.astype(jnp.float32) * inv
    shift = beta.astype(jnp.float32) - mean * scale
    return scale, shift


# ----------------------------------------------------------------------------
# Layout helpers / im2col fallback (XLA-level)
# ----------------------------------------------------------------------------
def _pad_to_grid(x_compact, n, h, w, c):
    x = x_compact.reshape(n, h, w, c)
    x = jnp.pad(x, ((0, 0), (2, 2), (1, 1), (0, 0)))
    return x.reshape(n, (h + 4) * (w + 2), c)


def _grid_to_compact(x_pad, n, h, w, c):
    x = x_pad.reshape(n, h + 4, w + 2, c)[:, 2:2 + h, 1:1 + w, :]
    return x.reshape(n * h * w, c)


def _im2col_nhwc(x_flat, n, h, w, c, k, stride, pad):
    # TODO(synk): the stride-2 3x3 convs and 1x1 downsamples still materialize
    # im2col patches; a strided implicit-GEMM A-side would remove this too.
    x = x_flat.reshape(n, h, w, c)
    if pad > 0:
        x = jnp.pad(x, ((0, 0), (pad, pad), (pad, pad), (0, 0)))
    ho = (h + 2 * pad - k) // stride + 1
    wo = (w + 2 * pad - k) // stride + 1
    cols = []
    for i in range(k):
        for j in range(k):
            cols.append(x[:, i:i + stride * ho:stride,
                             j:j + stride * wo:stride, :])
    patches = jnp.concatenate(cols, axis=-1) if len(cols) > 1 else cols[0]
    return patches.reshape(n * ho * wo, k * k * c), ho, wo


# ----------------------------------------------------------------------------
# Fused layer helpers
# ----------------------------------------------------------------------------
def _linear_bn(a, wmat, gamma, beta, relu, out_dtype=jnp.bfloat16):
    # Biases are omitted: the following training-mode BatchNorm's batch
    # statistics absorb a constant bias exactly, so the output is unchanged.
    y, s1, s2, m = pallas_matmul_stats(a, wmat)
    sc, sh = _bn_scale_shift(s1, s2, float(m), gamma, beta)
    return pallas_bn_apply_flat(y, sc, sh, m, relu=relu, out_dtype=out_dtype)


def _conv3x3_bn_padded(x_pad, w9, gamma, beta, n, h, w, residual=None, relu=True):
    y, s1, s2, cnt = pallas_conv3x3_stats(x_pad, w9, n, h, w)
    sc, sh = _bn_scale_shift(s1, s2, float(cnt), gamma, beta)
    return pallas_bn_apply_padded(y, sc, sh, n, h, w,
                                  residual=residual, relu=relu)


# ----------------------------------------------------------------------------
# ResNet-18 (CIFAR variant: 3x3 stem, maxpool=Identity, fc=Identity) + projector
# ----------------------------------------------------------------------------
def basic_block(x_pad, n, h, w, cin, p):
    stride, cout = p['stride'], p['cout']
    if 'conv1_w9' in p:
        # stride-1 block, identity shortcut: both convs via implicit GEMM.
        a1 = _conv3x3_bn_padded(x_pad, p['conv1_w9'], p['bn1_g'], p['bn1_b'],
                                n, h, w, relu=True)
        ho, wo = h, w
        res_pad = x_pad
    else:
        # stride-2 block: conv1 (3x3 s2) and downsample (1x1 s2) via fallback.
        x_c = _grid_to_compact(x_pad, n, h, w, cin)
        patches, ho, wo = _im2col_nhwc(x_c, n, h, w, cin, 3, stride, 1)
        a1c = _linear_bn(patches, p['conv1_w'], p['bn1_g'], p['bn1_b'], relu=True)
        a1 = _pad_to_grid(a1c, n, ho, wo, cout)
        dpatches, _, _ = _im2col_nhwc(x_c, n, h, w, cin, 1, stride, 0)
        rc = _linear_bn(dpatches, p['ds_w'], p['ds_g'], p['ds_b'], relu=False)
        res_pad = _pad_to_grid(rc, n, ho, wo, cout)

    out = _conv3x3_bn_padded(a1, p['conv2_w9'], p['bn2_g'], p['bn2_b'],
                             n, ho, wo, residual=res_pad, relu=True)
    return out, ho, wo


def projector_mlp(x, p):
    h1 = _linear_bn(x, p['w1'], p['g1'], p['be1'], relu=True)
    h2 = _linear_bn(h1, p['w2'], p['g2'], p['be2'], relu=True)
    return _linear_bn(h2, p['w3'], p['g3'], p['be3'], relu=False,
                      out_dtype=jnp.float32)


def base_method_forward(x_nchw, params, return_embedding=False):
    n, c, h, w = x_nchw.shape
    x_flat = (x_nchw.transpose(0, 2, 3, 1).reshape(n * h * w, c)
              .astype(jnp.bfloat16))

    # stem (cifar=True: 3x3 stride-1 conv, bias=False, maxpool -> Identity).
    # Cin=3 -> im2col fallback (K=27); everything after runs implicit GEMM.
    patches, ho, wo = _im2col_nhwc(x_flat, n, h, w, c, 3, 1, 1)
    act = _linear_bn(patches, params['conv1_w'], params['bn1_g'],
                     params['bn1_b'], relu=True)
    act_pad = _pad_to_grid(act, n, ho, wo, 64)
    cur_c = 64

    for stage in ('layer1', 'layer2', 'layer3', 'layer4'):
        for blk in params[stage]:
            act_pad, ho, wo = basic_block(act_pad, n, ho, wo, cur_c, blk)
            cur_c = blk['cout']

    # adaptive avg pool (1,1) + flatten(start_dim=1); fc = Identity
    feat = _grid_to_compact(act_pad, n, ho, wo, cur_c).astype(jnp.float32)
    embedding = jnp.mean(feat.reshape(n, ho * wo, cur_c), axis=1)
    if return_embedding:
        return embedding
    return projector_mlp(embedding, params['projector'])


# ----------------------------------------------------------------------------
# Deterministic parameter construction (weights pre-reshaped/transposed, bf16)
# ----------------------------------------------------------------------------
def make_params(key, proj_hidden, proj_out):
    keys = iter(jax.random.split(key, 256))

    def nk():
        return next(keys)

    def conv_w9(cout, cin):
        w = (jax.random.normal(nk(), (cout, cin, 3, 3), jnp.float32)
             * jnp.sqrt(2.0 / (cin * 9)))
        # [Cout, Cin, Kh, Kw] -> [9, Cin, Cout] (tap-major) for implicit GEMM.
        return jnp.transpose(w, (2, 3, 1, 0)).reshape(9, cin, cout).astype(
            jnp.bfloat16)

    def conv_wmat(cout, cin, k):
        w = (jax.random.normal(nk(), (cout, cin, k, k), jnp.float32)
             * jnp.sqrt(2.0 / (cin * k * k)))
        # [Cout, Cin, Kh, Kw] -> [Kh*Kw*Cin, Cout] matching im2col column order.
        return jnp.transpose(w, (2, 3, 1, 0)).reshape(k * k * cin, cout).astype(
            jnp.bfloat16)

    def bn(cch):
        return jnp.ones((cch,), jnp.float32), jnp.zeros((cch,), jnp.float32)

    def linear(din, dout):
        w = (jax.random.normal(nk(), (dout, din), jnp.float32)
             * jnp.sqrt(2.0 / din))
        return w.T.astype(jnp.bfloat16)            # pre-transposed [din, dout]

    def block(cin, cout, stride):
        p = {'stride': stride, 'cout': cout}
        if stride == 1 and cin == cout:
            p['conv1_w9'] = conv_w9(cout, cin)
        else:
            p['conv1_w'] = conv_wmat(cout, cin, 3)
            p['ds_w'] = conv_wmat(cout, cin, 1)
            p['ds_g'], p['ds_b'] = bn(cout)
        p['conv2_w9'] = conv_w9(cout, cout)
        p['bn1_g'], p['bn1_b'] = bn(cout)
        p['bn2_g'], p['bn2_b'] = bn(cout)
        return p

    params = {'conv1_w': conv_wmat(64, 3, 3)}
    params['bn1_g'], params['bn1_b'] = bn(64)
    params['layer1'] = [block(64, 64, 1), block(64, 64, 1)]
    params['layer2'] = [block(64, 128, 2), block(128, 128, 1)]
    params['layer3'] = [block(128, 256, 2), block(256, 256, 1)]
    params['layer4'] = [block(256, 512, 2), block(512, 512, 1)]

    proj = {'w1': linear(512, proj_hidden),
            'w2': linear(proj_hidden, proj_hidden),
            'w3': linear(proj_hidden, proj_out)}
    proj['g1'], proj['be1'] = bn(proj_hidden)
    proj['g2'], proj['be2'] = bn(proj_hidden)
    proj['g3'], proj['be3'] = bn(proj_out)
    params['projector'] = proj
    return params


if __name__ == "__main__":
    key = jax.random.PRNGKey(0)
    pkey, xkey = jax.random.split(key)

    proj_hidden_dim = 128
    proj_output_dim = 64

    params = make_params(pkey, proj_hidden_dim, proj_output_dim)
    # NCHW input like PyTorch: batch=2, 3 channels, 8x8 spatial.
    x = jax.random.normal(xkey, (2, 3, 8, 8), jnp.float32)

    emb = base_method_forward(x, params, return_embedding=True)
    out = base_method_forward(x, params, return_embedding=False)
    jax.block_until_ready((emb, out))

    assert emb.shape == (2, 512), emb.shape
    assert out.shape == (2, proj_output_dim), out.shape
    assert bool(jnp.all(jnp.isfinite(emb))) and bool(jnp.all(jnp.isfinite(out)))
    print("KERNEL_OK")
</pallas_src>

<mosaic_0001>
module attributes {stable_mosaic.version = 11 : i64} {
  func.func @_matmul_stats_kernel(%arg0: i32, %arg1: memref<128x27xbf16, #tpu.memory_space<vmem>>, %arg2: memref<27x64xbf16, #tpu.memory_space<vmem>>, %arg3: memref<128x64xbf16, #tpu.memory_space<vmem>>, %arg4: memref<8x64xf32, #tpu.memory_space<vmem>>) attributes {dimension_semantics = [#tpu.dimension_semantics<parallel>], iteration_bounds = array<i64: 1>, scalar_prefetch = 0 : i64, scratch_operands = 0 : i64, tpu.core_type = #tpu.core_type<tc>, window_params = [{transform_indices = @transform_0, window_bounds = array<i64: 128, 27>}, {pipeline_mode = #tpu.pipeline_mode<synchronous>, transform_indices = @transform_1, window_bounds = array<i64: 27, 64>}, {transform_indices = @transform_2, window_bounds = array<i64: 128, 64>}, {transform_indices = @transform_3, window_bounds = array<i64: 8, 64>}]} {
    %c0 = arith.constant 0 : index
    %c0_0 = arith.constant 0 : index
    %0 = vector.load %arg1[%c0, %c0_0] : memref<128x27xbf16, #tpu.memory_space<vmem>>, vector<128x27xbf16>
    %c0_1 = arith.constant 0 : index
    %c0_2 = arith.constant 0 : index
    %1 = vector.load %arg2[%c0_1, %c0_2] : memref<27x64xbf16, #tpu.memory_space<vmem>>, vector<27x64xbf16>
    %cst = arith.constant dense<0.000000e+00> : vector<128x64xf32>
    %2 = tpu.matmul %0, %1, %cst {dimension_numbers = #tpu.dot_dimension_numbers<[1], [0], [0], [1], [0, 0, 1, 1], [], []>} : vector<128x27xbf16>, vector<27x64xbf16>, vector<128x64xf32> -> vector<128x64xf32>
    %3 = arith.truncf %2 : vector<128x64xf32> to vector<128x64xbf16>
    %c0_3 = arith.constant 0 : index
    %c0_4 = arith.constant 0 : index
    %4 = vector.load %arg3[%c0_3, %c0_4] : memref<128x64xbf16, #tpu.memory_space<vmem>>, vector<128x64xbf16>
    tpu.vector_store %arg3[%c0_3, %c0_4], %3 {strides = array<i32>} : memref<128x64xbf16, #tpu.memory_space<vmem>>, vector<128x64xbf16>,
    %cst_5 = arith.constant dense<0.000000e+00> : vector<64xf32>
    %5 = vector.multi_reduction <add>, %2, %cst_5 [0] : vector<128x64xf32> to vector<64xf32>
    %6 = vector.shape_cast %5 : vector<64xf32> to vector<1x64xf32>
    %7 = arith.mulf %2, %2 : vector<128x64xf32>
    %cst_6 = arith.constant dense<0.000000e+00> : vector<64xf32>
    %8 = vector.multi_reduction <add>, %7, %cst_6 [0] : vector<128x64xf32> to vector<64xf32>
    %9 = vector.shape_cast %8 : vector<64xf32> to vector<1x64xf32>
    %10 = tpu.iota {dimensions = array<i32: 0>} : vector<8x64xi32>
    %c0_i32 = arith.constant 0 : i32
    %11 = vector.broadcast %c0_i32 : i32 to vector<8x64xi32>
    %12 = arith.cmpi eq, %10, %11 : vector<8x64xi32>
    %c1_i32 = arith.constant 1 : i32
    %13 = vector.broadcast %c1_i32 : i32 to vector<8x64xi32>
    %14 = arith.cmpi eq, %10, %13 : vector<8x64xi32>
    %cst_7 = arith.constant 0.000000e+00 : f32
    %15 = vector.shape_cast %9 : vector<1x64xf32> to vector<1x64xf32>
    %16 = vector.broadcast %15 : vector<1x64xf32> to vector<8x64xf32>
    %17 = vector.broadcast %cst_7 : f32 to vector<8x64xf32>
    %18 = arith.select %14, %16, %17 : vector<8x64xi1>, vector<8x64xf32>
    %19 = vector.shape_cast %6 : vector<1x64xf32> to vector<1x64xf32>
    %20 = vector.broadcast %19 : vector<1x64xf32> to vector<8x64xf32>
    %21 = arith.select %12, %20, %18 : vector<8x64xi1>, vector<8x64xf32>
    %c0_8 = arith.constant 0 : index
    %c0_9 = arith.constant 0 : index
    %22 = vector.load %arg4[%c0_8, %c0_9] : memref<8x64xf32, #tpu.memory_space<vmem>>, vector<8x64xf32>
    tpu.vector_store %arg4[%c0_8, %c0_9], %21 {strides = array<i32>} : memref<8x64xf32, #tpu.memory_space<vmem>>, vector<8x64xf32>,
    return
  }
  func.func @transform_0(%arg0: i32) -> (i32, i32) {
    %c0_i32 = arith.constant 0 : i32
    %c0_i32_0 = arith.constant 0 : i32
    return %arg0, %c0_i32 : i32, i32
  }
  func.func @transform_1(%arg0: i32) -> (i32, i32) {
    %c0_i32 = arith.constant 0 : i32
    %c0_i32_0 = arith.constant 0 : i32
    %c0_i32_1 = arith.constant 0 : i32
    return %c0_i32, %c0_i32_0 : i32, i32
  }
  func.func @transform_2(%arg0: i32) -> (i32, i32) {
    %c0_i32 = arith.constant 0 : i32
    %c0_i32_0 = arith.constant 0 : i32
    return %arg0, %c0_i32 : i32, i32
  }
  func.func @transform_3(%arg0: i32) -> (i32, i32) {
    %c0_i32 = arith.constant 0 : i32
    %c0_i32_0 = arith.constant 0 : i32
    return %arg0, %c0_i32 : i32, i32
  }
}

</mosaic_0001>

<llo_original>
// kernel: tpu_custom_call.1
$region0: #{tpu_custom_call.1}
  #allocation0 [shape = 'u32[]', space=smem, size = 0x4, offset = 0x4, fixed_abs, tag = 'smem constant byte address 0x4 - core index']
  #allocation1 [shape = 'u32[144,128]{1,0:T(1,128)}', space=vmem, size = 0x12000, scoped, tag = 'internal scratch']
  %s0 = inlined_call_operand.vmem [shape: bf16[128,27], index: 0, kind: input, shape index: {}]
  %s1 = inlined_call_operand.vmem [shape: bf16[27,64], index: 1, kind: input, shape index: {}]
  %s2 = inlined_call_operand.vmem [shape: bf16[128,64], index: 2, kind: output, shape index: {0}]
  %s3 = inlined_call_operand.hbm [shape: f32[8,64], index: 3, kind: output, shape index: {1}]
  %4 = xla_tuple %s2, %s3
  %s5 = sld [smem:[#allocation0]]
  $region26: #{tpu_custom_call.1} parent=0
    _
  %s7 = ssub.s32 1, %s5
  %s8 = scalar_select 0, %s7, %s5
  $region1: #{tpu_custom_call.1} parent=0
    #allocation2 [shape = 'u8[4096]{0}', space=vmem, size = 0x1000, scoped, tag = 'output window, operand 1, single buffered']
    #allocation3 [shape = 's32[1]{0}', space=sflag, size = 0x4, scoped, tag = 'scoped memory for tpu_custom_call.1']
    %9 = vsyncpa [#allocation3], 0
    // Predicated region
    $region2: #{tpu_custom_call.1} parent=1 // pred_check
      _
    $region3: #{tpu_custom_call.1} parent=1 // pred_check_branch
      %11 = sbr.rel (0) target = $region5
    $region4: #{tpu_custom_call.1} parent=1 // pred_region
      _
    $region5: #{tpu_custom_call.1} parent=1 // pred_fallthru
      _
    // Predicated region
    $region6: #{tpu_custom_call.1} parent=1 // pred_check
      _
    $region7: #{tpu_custom_call.1} parent=1 // pred_check_branch
      %13 = sbr.rel (0) target = $region9
    $region8: #{tpu_custom_call.1} parent=1 // pred_region
      _
    $region9: #{tpu_custom_call.1} parent=1 // pred_fallthru
      _
    %v15 = vld [vmem:[%s0] sm:$0xf]
    %v16 = vld [vmem:[%s0 + $0x4] sm:$0xf]
    %v17 = vld [vmem:[%s0 + $0x8] sm:$0xf]
    %v18 = vld [vmem:[%s0 + $0xc] sm:$0xf]
    %v19 = vld [vmem:[%s0 + $0x10] sm:$0xf]
    %v20 = vld [vmem:[%s0 + $0x14] sm:$0xf]
    %v21 = vld [vmem:[%s0 + $0x18] sm:$0xf]
    %v22 = vld [vmem:[%s0 + $0x1c] sm:$0xf]
    %v23 = vld [vmem:[%s0 + $0x20] sm:$0xf]
    %v24 = vld [vmem:[%s0 + $0x24] sm:$0xf]
    %v25 = vld [vmem:[%s0 + $0x28] sm:$0xf]
    %v26 = vld [vmem:[%s0 + $0x2c] sm:$0xf]
    %v27 = vld [vmem:[%s0 + $0x30] sm:$0xf]
    %v28 = vld [vmem:[%s0 + $0x34] sm:$0xf]
    %v29 = vld [vmem:[%s0 + $0x38] sm:$0xf]
    %v30 = vld [vmem:[%s0 + $0x3c] sm:$0xf]
    %v31 = vld [vmem:[%s1] sm:$0xf]
    %v32 = vld [vmem:[%s1 + $0x4] sm:$0xf]
    %v33 = vld [vmem:[%s1 + $0x8] sm:$0xf]
    %v34 = vld [vmem:[%s1 + $0xc] sm:$0x3]
    %v51 = vunpack.c.l.b16 %v15
    %v52 = vunpack.c.l.b16 %v16
    %v53 = vunpack.c.l.b16 %v17
    %v54 = vunpack.c.l.b16 %v18
    %v55 = vunpack.c.l.b16 %v19
    %v56 = vunpack.c.l.b16 %v20
    %v57 = vunpack.c.l.b16 %v21
    %v58 = vunpack.c.l.b16 %v22
    %v59 = vunpack.c.l.b16 %v23
    %v60 = vunpack.c.l.b16 %v24
    %v61 = vunpack.c.l.b16 %v25
    %v62 = vunpack.c.l.b16 %v26
    %v63 = vunpack.c.l.b16 %v27
    %v64 = vunpack.c.l.b16 %v28
    %v65 = vunpack.c.l.b16 %v29
    %v66 = vunpack.c.l.b16 %v30
    %v67 = vpack.c.b16 %v52, %v51
    %v68 = vpack.c.b16 %v54, %v53
    %v69 = vpack.c.b16 %v56, %v55
    %v70 = vpack.c.b16 %v58, %v57
    %v71 = vpack.c.b16 %v60, %v59
    %v72 = vpack.c.b16 %v62, %v61
    %v73 = vpack.c.b16 %v64, %v63
    %v74 = vpack.c.b16 %v66, %v65
    %v79 = vunpack.c.l.b16 %v31
    %v80 = vunpack.c.l.b16 %v32
    %v81 = vunpack.c.l.b16 %v33
    %v82 = vunpack.c.l.b16 %v34
    %v83 = vpack.c.b16 %v80, %v79
    %v84 = vpack.c.b16 %v82, %v81
    %vm86 = vcmask 220160
    %v88 = vsel %vm86, %v67, 0
    %v91 = vsel %vm86, %v68, 0
    %v94 = vsel %vm86, %v69, 0
    %v97 = vsel %vm86, %v70, 0
    %v100 = vsel %vm86, %v71, 0
    %v103 = vsel %vm86, %v72, 0
    %v106 = vsel %vm86, %v73, 0
    %v109 = vsel %vm86, %v74, 0
    %vm111 = vcmask 1044480
    %vm112 = vcmask 1045504
    %v113 = vsel %vm111, 4294967295, 65535
    %v114 = vsel %vm112, %v113, 0
    %v116 = vand.u32 %v84, %v114
    %118 = vmatprep.subr.bf16.mxu0 0
    %119 = vmatpush1.bf16.msra.mxu0 %v83
    %120 = vmatprep.subr.bf16.mxu0 0
    %121 = vmatpush1.bf16.msra.mxu0 %v116
    %122 = vmatprep.subr.bf16.mxu0 0
    %123 = vmatpush1.bf16.msra.mxu0 0
    %124 = vmatprep.subr.bf16.mxu0 0
    %125 = vmatpush1.bf16.msra.mxu0 0
    %126 = vmatprep.subr.bf16.mxu0 0
    %127 = vmatpush1.bf16.msra.mxu0 0
    %128 = vmatprep.subr.bf16.mxu0 0
    %129 = vmatpush1.bf16.msra.mxu0 0
    %130 = vmatprep.subr.bf16.mxu0 0
    %131 = vmatpush1.bf16.msra.mxu0 0
    %132 = vmatprep.subr.bf16.mxu0 0
    %133 = vmatpush1.bf16.msra.mxu0 0
    %134 = vmatprep.subr.bf16.mxu0 0
    %135 = vmatpush1.bf16.msra.mxu0 0
    %136 = vmatprep.subr.bf16.mxu0 0
    %137 = vmatpush1.bf16.msra.mxu0 0
    %138 = vmatprep.subr.bf16.mxu0 0
    %139 = vmatpush1.bf16.msra.mxu0 0
    %140 = vmatprep.subr.bf16.mxu0 0
    %141 = vmatpush1.bf16.msra.mxu0 0
    %142 = vmatprep.subr.bf16.mxu0 0
    %143 = vmatpush1.bf16.msra.mxu0 0
    %144 = vmatprep.subr.bf16.mxu0 0
    %145 = vmatpush1.bf16.msra.mxu0 0
    %146 = vmatprep.subr.bf16.mxu0 0
    %147 = vmatpush1.bf16.msra.mxu0 0
    %148 = vmatprep.subr.bf16.mxu0 0
    %149 = vmatpush1.bf16.msra.mxu0 0
    %150 = vmatprep.mubr.bf16.mxu0 0
    %151 = vmatmul.mubr.bf16.gmra.mrb[0].mxu0 %v88
    %v152 = vpop.f32.mrb[0].mxu0
    %v153 = vadd.f32 0.0, %v152
    %v154 = vpop.f32.mrb[0].mxu0
    %v155 = vpop.f32.mrb[0].mxu0
    %v156 = vadd.f32 0.0, %v155
    %v157 = vpop.f32.mrb[0].mxu0
    %158 = vmatprep.mubr.bf16.mxu0 0
    %159 = vmatmul.mubr.bf16.gmra.mrb[0].mxu0 %v91
    %v160 = vpop.f32.mrb[0].mxu0
    %v161 = vadd.f32 0.0, %v160
    %v162 = vpop.f32.mrb[0].mxu0
    %v163 = vpop.f32.mrb[0].mxu0
    %v164 = vadd.f32 0.0, %v163
    %v165 = vpop.f32.mrb[0].mxu0
    %166 = vmatprep.mubr.bf16.mxu0 0
    %167 = vmatmul.mubr.bf16.gmra.mrb[0].mxu0 %v94
    %v168 = vpop.f32.mrb[0].mxu0
    %v169 = vadd.f32 0.0, %v168
    %v170 = vpop.f32.mrb[0].mxu0
    %v171 = vpop.f32.mrb[0].mxu0
    %v172 = vadd.f32 0.0, %v171
    %v173 = vpop.f32.mrb[0].mxu0
    %174 = vmatprep.mubr.bf16.mxu0 0
    %175 = vmatmul.mubr.bf16.gmra.mrb[0].mxu0 %v97
    %v176 = vpop.f32.mrb[0].mxu0
    %v177 = vadd.f32 0.0, %v176
    %v178 = vpop.f32.mrb[0].mxu0
    %v179 = vpop.f32.mrb[0].mxu0
    %v180 = vadd.f32 0.0, %v179
    %v181 = vpop.f32.mrb[0].mxu0
    %182 = vmatprep.mubr.bf16.mxu0 0
    %183 = vmatmul.mubr.bf16.gmra.mrb[0].mxu0 %v100
    %v184 = vpop.f32.mrb[0].mxu0
    %v185 = vadd.f32 0.0, %v184
    %v186 = vpop.f32.mrb[0].mxu0
    %v187 = vpop.f32.mrb[0].mxu0
    %v188 = vadd.f32 0.0, %v187
    %v189 = vpop.f32.mrb[0].mxu0
    %190 = vmatprep.mubr.bf16.mxu0 0
    %191 = vmatmul.mubr.bf16.gmra.mrb[0].mxu0 %v103
    %v192 = vpop.f32.mrb[0].mxu0
    %v193 = vadd.f32 0.0, %v192
    %v194 = vpop.f32.mrb[0].mxu0
    %v195 = vpop.f32.mrb[0].mxu0
    %v196 = vadd.f32 0.0, %v195
    %v197 = vpop.f32.mrb[0].mxu0
    %198 = vmatprep.mubr.bf16.mxu0 0
    %199 = vmatmul.mubr.bf16.gmra.mrb[0].mxu0 %v106
    %v200 = vpop.f32.mrb[0].mxu0
    %v201 = vadd.f32 0.0, %v200
    %v202 = vpop.f32.mrb[0].mxu0
    %v203 = vpop.f32.mrb[0].mxu0
    %v204 = vadd.f32 0.0, %v203
    %v205 = vpop.f32.mrb[0].mxu0
    %206 = vmatprep.mubr.bf16.mxu0 0
    %207 = vmatmul.mubr.bf16.gmra.mrb[0].mxu0 %v109
    %v208 = vpop.f32.mrb[0].mxu0
    %v209 = vadd.f32 0.0, %v208
    %v210 = vpop.f32.mrb[0].mxu0
    %v211 = vpop.f32.mrb[0].mxu0
    %v212 = vadd.f32 0.0, %v211
    %v213 = vpop.f32.mrb[0].mxu0
    %214 = vdwg.mxu0
    %v215 = vpack.c.bf16 %v156, %v153
    %v216 = vpack.c.bf16 %v164, %v161
    %v217 = vpack.c.bf16 %v172, %v169
    %v218 = vpack.c.bf16 %v180, %v177
    %v219 = vpack.c.bf16 %v188, %v185
    %v220 = vpack.c.bf16 %v196, %v193
    %v221 = vpack.c.bf16 %v204, %v201
    %v222 = vpack.c.bf16 %v212, %v209
    %v231 = vunpack.c.l.b16 %v215
    %v232 = vunpack.c.h.b16 %v215
    %v233 = vunpack.c.l.b16 %v216
    %v234 = vunpack.c.h.b16 %v216
    %v235 = vunpack.c.l.b16 %v217
    %v236 = vunpack.c.h.b16 %v217
    %v237 = vunpack.c.l.b16 %v218
    %v238 = vunpack.c.h.b16 %v218
    %v239 = vunpack.c.l.b16 %v219
    %v240 = vunpack.c.h.b16 %v219
    %v241 = vunpack.c.l.b16 %v220
    %v242 = vunpack.c.h.b16 %v220
    %v243 = vunpack.c.l.b16 %v221
    %v244 = vunpack.c.h.b16 %v221
    %v245 = vunpack.c.l.b16 %v222
    %v246 = vunpack.c.h.b16 %v222
    %v247 = vpack.c.b16 %v231, %v231
    %v248 = vpack.c.b16 %v232, %v232
    %v249 = vpack.c.b16 %v233, %v233
    %v250 = vpack.c.b16 %v234, %v234
    %v251 = vpack.c.b16 %v235, %v235
    %v252 = vpack.c.b16 %v236, %v236
    %v253 = vpack.c.b16 %v237, %v237
    %v254 = vpack.c.b16 %v238, %v238
    %v255 = vpack.c.b16 %v239, %v239
    %v256 = vpack.c.b16 %v240, %v240
    %v257 = vpack.c.b16 %v241, %v241
    %v258 = vpack.c.b16 %v242, %v242
    %v259 = vpack.c.b16 %v243, %v243
    %v260 = vpack.c.b16 %v244, %v244
    %v261 = vpack.c.b16 %v245, %v245
    %v262 = vpack.c.b16 %v246, %v246
    %vm279 = vcmask 519168
    %280 = vst.msk [vmem:[%s2] sm:$0xf] %vm279, %v247
    %281 = vst.msk [vmem:[%s2 + $0x4] sm:$0xf] %vm279, %v248
    %282 = vst.msk [vmem:[%s2 + $0x8] sm:$0xf] %vm279, %v249
    %283 = vst.msk [vmem:[%s2 + $0xc] sm:$0xf] %vm279, %v250
    %284 = vst.msk [vmem:[%s2 + $0x10] sm:$0xf] %vm279, %v251
    %285 = vst.msk [vmem:[%s2 + $0x14] sm:$0xf] %vm279, %v252
    %286 = vst.msk [vmem:[%s2 + $0x18] sm:$0xf] %vm279, %v253
    %287 = vst.msk [vmem:[%s2 + $0x1c] sm:$0xf] %vm279, %v254
    %288 = vst.msk [vmem:[%s2 + $0x20] sm:$0xf] %vm279, %v255
    %289 = vst.msk [vmem:[%s2 + $0x24] sm:$0xf] %vm279, %v256
    %290 = vst.msk [vmem:[%s2 + $0x28] sm:$0xf] %vm279, %v257
    %291 = vst.msk [vmem:[%s2 + $0x2c] sm:$0xf] %vm279, %v258
    %292 = vst.msk [vmem:[%s2 + $0x30] sm:$0xf] %vm279, %v259
    %293 = vst.msk [vmem:[%s2 + $0x34] sm:$0xf] %vm279, %v260
    %294 = vst.msk [vmem:[%s2 + $0x38] sm:$0xf] %vm279, %v261
    %295 = vst.msk [vmem:[%s2 + $0x3c] sm:$0xf] %vm279, %v262
    %vm296 = vcmask 523264
    %v297 = vsel %vm296, %v153, 0.0
    %v298 = vsel %vm296, %v156, 0.0
    %v299 = vadd.f32 %v297, %v298
    %v300 = vsel %vm296, %v161, 0.0
    %v301 = vadd.f32 %v299, %v300
    %v302 = vsel %vm296, %v164, 0.0
    %v303 = vadd.f32 %v301, %v302
    %v304 = vsel %vm296, %v169, 0.0
    %v305 = vadd.f32 %v303, %v304
    %v306 = vsel %vm296, %v172, 0.0
    %v307 = vadd.f32 %v305, %v306
    %v308 = vsel %vm296, %v177, 0.0
    %v309 = vadd.f32 %v307, %v308
    %v310 = vsel %vm296, %v180, 0.0
    %v311 = vadd.f32 %v309, %v310
    %v312 = vsel %vm296, %v185, 0.0
    %v313 = vadd.f32 %v311, %v312
    %v314 = vsel %vm296, %v188, 0.0
    %v315 = vadd.f32 %v313, %v314
    %v316 = vsel %vm296, %v193, 0.0
    %v317 = vadd.f32 %v315, %v316
    %v318 = vsel %vm296, %v196, 0.0
    %v319 = vadd.f32 %v317, %v318
    %v320 = vsel %vm296, %v201, 0.0
    %v321 = vadd.f32 %v319, %v320
    %v322 = vsel %vm296, %v204, 0.0
    %v323 = vadd.f32 %v321, %v322
    %v324 = vsel %vm296, %v209, 0.0
    %v325 = vadd.f32 %v323, %v324
    %v326 = vsel %vm296, %v212, 0.0
    %v327 = vadd.f32 %v325, %v326
    %v328 = vrot.slane %v327, 4
    %v329 = vadd.f32 %v327, %v328
    %v330 = vrot.slane %v329, 2
    %v331 = vadd.f32 %v329, %v330
    %v332 = vrot.slane %v331, 1
    %v333 = vadd.f32 %v331, %v332
    %v334 = vmul.f32 %v153, %v153
    %v335 = vmul.f32 %v156, %v156
    %v336 = vmul.f32 %v161, %v161
    %v337 = vmul.f32 %v164, %v164
    %v338 = vmul.f32 %v169, %v169
    %v339 = vmul.f32 %v172, %v172
    %v340 = vmul.f32 %v177, %v177
    %v341 = vmul.f32 %v180, %v180
    %v342 = vmul.f32 %v185, %v185
    %v343 = vmul.f32 %v188, %v188
    %v344 = vmul.f32 %v193, %v193
    %v345 = vmul.f32 %v196, %v196
    %v346 = vmul.f32 %v201, %v201
    %v347 = vmul.f32 %v204, %v204
    %v348 = vmul.f32 %v209, %v209
    %v349 = vmul.f32 %v212, %v212
    %v350 = vsel %vm296, %v334, 0.0
    %v351 = vsel %vm296, %v335, 0.0
    %v352 = vadd.f32 %v350, %v351
    %v353 = vsel %vm296, %v336, 0.0
    %v354 = vadd.f32 %v352, %v353
    %v355 = vsel %vm296, %v337, 0.0
    %v356 = vadd.f32 %v354, %v355
    %v357 = vsel %vm296, %v338, 0.0
    %v358 = vadd.f32 %v356, %v357
    %v359 = vsel %vm296, %v339, 0.0
    %v360 = vadd.f32 %v358, %v359
    %v361 = vsel %vm296, %v340, 0.0
    %v362 = vadd.f32 %v360, %v361
    %v363 = vsel %vm296, %v341, 0.0
    %v364 = vadd.f32 %v362, %v363
    %v365 = vsel %vm296, %v342, 0.0
    %v366 = vadd.f32 %v364, %v365
    %v367 = vsel %vm296, %v343, 0.0
    %v368 = vadd.f32 %v366, %v367
    %v369 = vsel %vm296, %v344, 0.0
    %v370 = vadd.f32 %v368, %v369
    %v371 = vsel %vm296, %v345, 0.0
    %v372 = vadd.f32 %v370, %v371
    %v373 = vsel %vm296, %v346, 0.0
    %v374 = vadd.f32 %v372, %v373
    %v375 = vsel %vm296, %v347, 0.0
    %v376 = vadd.f32 %v374, %v375
    %v377 = vsel %vm296, %v348, 0.0
    %v378 = vadd.f32 %v376, %v377
    %v379 = vsel %vm296, %v349, 0.0
    %v380 = vadd.f32 %v378, %v379
    %v381 = vrot.slane %v380, 4
    %v382 = vadd.f32 %v380, %v381
    %v383 = vrot.slane %v382, 2
    %v384 = vadd.f32 %v382, %v383
    %v385 = vrot.slane %v384, 1
    %v386 = vadd.f32 %v384, %v385
    %v387 = vlaneseq
    %v388 = vshrl.u32 %v387, 7
    %vm389 = vcmp.eq.s32.totalorder %v388, 0
    %vm390 = vcmp.eq.s32.totalorder %v388, 1
    %v391 = vsel %vm390, %v386, 0.0
    %v392 = vsel %vm389, %v333, %v391
    %393 = vst.msk [vmem:[#allocation2] sm:$0xff] %vm296, %v392
    // Predicated region
    $region10: #{tpu_custom_call.1} parent=1 // pred_check
      _
    $region11: #{tpu_custom_call.1} parent=1 // pred_check_branch
      %395 = sbr.rel (0) target = $region13
    $region12: #{tpu_custom_call.1} parent=1 // pred_region
      _
    $region13: #{tpu_custom_call.1} parent=1 // pred_fallthru
      _
    // Predicated region
    $region14: #{tpu_custom_call.1} parent=1 // pred_check
      _
    $region15: #{tpu_custom_call.1} parent=1 // pred_check_branch
      %397 = sbr.rel (0) target = $region17
    $region16: #{tpu_custom_call.1} parent=1 // pred_region
      %s399 = ssub.s32 128, 128
      %400 = vsyncadd [#allocation3], %s399
      %s402 = sshll.u32 [#allocation2], 4
      %s403 = int_to_ptr.vmem [resolvable:$true] %s402
      %405 = dma.vmem_to_hbm [thread:$0]  %s403, 128, %s3, [#allocation3]
    $region17: #{tpu_custom_call.1} parent=1 // pred_fallthru
      _
    // Predicated region
    $region18: #{tpu_custom_call.1} parent=1 // pred_check
      _
    $region19: #{tpu_custom_call.1} parent=1 // pred_check_branch
      %407 = sbr.rel (0) target = $region21
    $region20: #{tpu_custom_call.1} parent=1 // pred_region
      _
    $region21: #{tpu_custom_call.1} parent=1 // pred_fallthru
      _
    // Predicated region
    $region22: #{tpu_custom_call.1} parent=1 // pred_check
      _
    $region23: #{tpu_custom_call.1} parent=1 // pred_check_branch
      %409 = sbr.rel (0) target = $region25
    $region24: #{tpu_custom_call.1} parent=1 // pred_region
      %410 = dma.done [#allocation3], 128
    $region25: #{tpu_custom_call.1} parent=1 // pred_fallthru
      _
    %411 = vsyncpa [#allocation3], 1

</llo_original>
